<compile_context>
chip_gen: v5e
topology: v5e:2x2
jax: 0.10.0
libtpu: 0.0.40
codegen_flags: <defaults>
</compile_context>

<pallas_src>
import jax
import jax.numpy as jnp
from jax.experimental import pallas as pl
from jax.experimental.pallas import tpu as pltpu

_LANES = 128
_W_R, _W_G, _W_B = 0.299, 0.587, 0.114


def _make_light_loss_kernel(has_mask, ts, s_rows, ragged):
    """Build the kernel body.

    has_mask : compile a variant with / without the mask operand.
    ts       : row-tile size (rows of the (rows, 128) pixel slab per step).
    s_rows   : number of rows actually present in the padded pixel slab.
    ragged   : True if the last row-tile hangs past the end of the slab (its
               out-of-bounds rows hold unspecified data and must be zeroed).
    """

    def kernel(*refs):
        if has_mask:
            out_ref, gt_ref, mask_ref, part_ref = refs
        else:
            out_ref, gt_ref, part_ref = refs

        f32 = jnp.float32
        # lum(out) - lum(gt) = sum_c w_c * (out_c - gt_c): 3 subs + 3 muls
        # + 2 adds instead of 6 muls + 4 adds + 1 sub.
        d = ((out_ref[0, 0].astype(f32) - gt_ref[0, 0].astype(f32)) * _W_R
             + (out_ref[0, 1].astype(f32) - gt_ref[0, 1].astype(f32)) * _W_G
             + (out_ref[0, 2].astype(f32) - gt_ref[0, 2].astype(f32)) * _W_B)

        if has_mask:
            # lum_o*m - lum_g*m == m * (lum_o - lum_g)
            d = d * mask_ref[0, 0].astype(f32)

        diff = jnp.abs(d)

        if ragged:
            # Zero the rows of the (partial) last tile that lie past the slab.
            row0 = pl.program_id(1) * ts
            rows = jax.lax.broadcasted_iota(jnp.int32, (ts, _LANES), 0) + row0
            diff = jnp.where(rows < s_rows, diff, 0.0)

        # Per-lane partial sums only (plain VPU vreg adds); the cross-lane
        # reduce and the mean denominator happen once, in the wrapper.
        part_ref[0, 0] = jnp.sum(diff, axis=0, keepdims=True)

    return kernel


def light_loss(output, gt, mask=None, *, ts_max=2048):
    """Pallas TPU implementation of light_loss.forward (returns scalar loss)."""
    B, C, H, W = output.shape
    assert C >= 3, "light_loss needs at least 3 channels (RGB)"
    P = H * W

    # Flatten H*W into a lane-dense (rows, 128) slab.  Free metadata reshape
    # when P % 128 == 0; otherwise zero-pad the pixel axis (padded pixels
    # contribute |0 - 0| = 0, and the denominator uses the true B*H*W).
    P_pad = ((P + _LANES - 1) // _LANES) * _LANES
    S = P_pad // _LANES                       # pixel rows of width 128
    need_pad = P_pad != P

    # RGB selection strategy:
    #   * No padding needed -> keep all C channels; the BlockSpec channel-block
    #     of size 3 at block index 0 DMAs only channels 0..2 (no wrapper copy,
    #     no HBM traffic for channels >= 3).
    #   * Padding needed    -> we copy anyway, so slice to 3 channels first to
    #     keep the pad copy minimal.
    if need_pad and C > 3:
        out_src, gt_src, c_slab = output[:, :3], gt[:, :3], 3
    else:
        out_src, gt_src, c_slab = output, gt, C

    def to_slab(x, ch):
        x = x.reshape(B, ch, P)
        if need_pad:
            x = jnp.pad(x, ((0, 0), (0, 0), (0, P_pad - P)))
        return x.reshape(B, ch, S, _LANES)

    o = to_slab(out_src, c_slab)
    g = to_slab(gt_src, c_slab)

    # Row-tile size.  ts_max = 2048 rows -> 2048*128 px/tile: at f32 that is
    # 2*(3 ch) + 1 mask ~= 7 MiB live per step, ~14 MiB double-buffered,
    # comfortably inside scoped VMEM on v5e/v6e and v7x (64 MiB physical).
    TS = S if S <= ts_max else ts_max
    NP = pl.cdiv(S, TS)
    ragged = (S % TS) != 0

    has_mask = mask is not None
    in_specs = [
        pl.BlockSpec((1, 3, TS, _LANES), lambda b, p: (b, 0, p, 0)),
        pl.BlockSpec((1, 3, TS, _LANES), lambda b, p: (b, 0, p, 0)),
    ]
    args = [o, g]
    if has_mask:
        if mask.dtype == jnp.bool_:
            mask = mask.astype(jnp.float32)
        mk = to_slab(jnp.broadcast_to(mask, (B, 1, H, W)), 1)
        in_specs.append(
            pl.BlockSpec((1, 1, TS, _LANES), lambda b, p: (b, 0, p, 0)))
        args.append(mk)

    partials = pl.pallas_call(
        _make_light_loss_kernel(has_mask, TS, S, ragged),
        out_shape=jax.ShapeDtypeStruct((B, NP, 1, _LANES), jnp.float32),
        grid_spec=pltpu.PrefetchScalarGridSpec(
            num_scalar_prefetch=0,
            grid=(B, NP),
            in_specs=in_specs,
            out_specs=pl.BlockSpec((1, 1, 1, _LANES),
                                   lambda b, p: (b, p, 0, 0)),
        ),
        compiler_params=pltpu.CompilerParams(
            # No carried accumulator -> every grid point is independent; lets
            # the grid shard across both TensorCores on megacore / v7x parts.
            dimension_semantics=("parallel", "parallel"),
            vmem_limit_bytes=32 * 1024 * 1024,
        ),
    )(*args)

    # Final cross-lane reduce + mean denominator (true B*H*W) in plain JAX.
    return jnp.sum(partials) / jnp.float32(B * P)


def _reference(output, gt, mask=None):
    lo = (output[:, 0:1] * 0.299 + output[:, 1:2] * 0.587
          + output[:, 2:3] * 0.114)
    lg = (gt[:, 0:1] * 0.299 + gt[:, 1:2] * 0.587 + gt[:, 2:3] * 0.114)
    if mask is not None:
        lo = lo * mask
        lg = lg * mask
    return jnp.mean(jnp.abs(lo - lg))


if __name__ == "__main__":
    key = jax.random.PRNGKey(0)
    ks = jax.random.split(key, 9)

    # Case 1: small RGB images, with and without mask (P % 128 == 0 path).
    B, C, H, W = 2, 3, 16, 16
    output = jax.random.uniform(ks[0], (B, C, H, W), dtype=jnp.float32)
    gt = jax.random.uniform(ks[1], (B, C, H, W), dtype=jnp.float32)
    mask = (jax.random.uniform(ks[2], (B, 1, H, W)) > 0.5).astype(jnp.float32)

    loss = jax.block_until_ready(light_loss(output, gt))
    ref = _reference(output, gt)
    assert jnp.allclose(loss, ref, atol=1e-6, rtol=1e-5), (loss, ref)

    loss_m = jax.block_until_ready(light_loss(output, gt, mask))
    ref_m = _reference(output, gt, mask)
    assert jnp.allclose(loss_m, ref_m, atol=1e-6, rtol=1e-5), (loss_m, ref_m)

    # Case 2: H*W not a multiple of 128 (zero-pad path) and a tiny row tile so
    # the ragged last-tile row-masking path and multi-tile grid are exercised.
    B2, H2, W2 = 2, 33, 40                      # P=1320 -> padded to 1408, S=11
    o2 = jax.random.uniform(ks[3], (B2, 3, H2, W2), dtype=jnp.float32)
    g2 = jax.random.uniform(ks[4], (B2, 3, H2, W2), dtype=jnp.float32)
    m2 = (jax.random.uniform(ks[5], (B2, 1, H2, W2)) > 0.5).astype(jnp.float32)

    loss2 = jax.block_until_ready(light_loss(o2, g2, ts_max=8))
    ref2 = _reference(o2, g2)
    assert jnp.allclose(loss2, ref2, atol=1e-6, rtol=1e-5), (loss2, ref2)

    loss2m = jax.block_until_ready(light_loss(o2, g2, m2, ts_max=8))
    ref2m = _reference(o2, g2, m2)
    assert jnp.allclose(loss2m, ref2m, atol=1e-6, rtol=1e-5), (loss2m, ref2m)

    # Case 3: C > 3 (e.g. RGBA) -- RGB channels selected via the BlockSpec
    # channel block, no wrapper slice copy; also exercises bf16 inputs.
    B3, C3, H3, W3 = 2, 4, 16, 16
    o3 = jax.random.uniform(ks[6], (B3, C3, H3, W3)).astype(jnp.bfloat16)
    g3 = jax.random.uniform(ks[7], (B3, C3, H3, W3)).astype(jnp.bfloat16)
    m3 = (jax.random.uniform(ks[8], (B3, 1, H3, W3)) > 0.5).astype(jnp.float32)

    loss3 = jax.block_until_ready(light_loss(o3, g3, m3))
    ref3 = _reference(o3.astype(jnp.float32), g3.astype(jnp.float32), m3)
    assert jnp.allclose(loss3, ref3, atol=5e-3, rtol=5e-3), (loss3, ref3)

    print("KERNEL_OK")
</pallas_src>

<mosaic_0001>
module attributes {stable_mosaic.version = 11 : i64} {
  func.func @kernel(%arg0: i32, %arg1: i32, %arg2: memref<1x3x2x128xf32, #tpu.memory_space<vmem>>, %arg3: memref<1x3x2x128xf32, #tpu.memory_space<vmem>>, %arg4: memref<1x1x1x128xf32, #tpu.memory_space<vmem>>) attributes {dimension_semantics = [#tpu.dimension_semantics<parallel>, #tpu.dimension_semantics<parallel>], iteration_bounds = array<i64: 2, 1>, scalar_prefetch = 0 : i64, scratch_operands = 0 : i64, tpu.core_type = #tpu.core_type<tc>, window_params = [{transform_indices = @transform_0, window_bounds = array<i64: 1, 3, 2, 128>}, {transform_indices = @transform_1, window_bounds = array<i64: 1, 3, 2, 128>}, {transform_indices = @transform_2, window_bounds = array<i64: 1, 1, 1, 128>}]} {
    %c0 = arith.constant 0 : index
    %c0_0 = arith.constant 0 : index
    %c0_1 = arith.constant 0 : index
    %c0_2 = arith.constant 0 : index
    %0 = vector.load %arg2[%c0, %c0_0, %c0_1, %c0_2] : memref<1x3x2x128xf32, #tpu.memory_space<vmem>>, vector<1x1x2x128xf32>
    %1 = vector.shape_cast %0 : vector<1x1x2x128xf32> to vector<2x128xf32>
    %c0_3 = arith.constant 0 : index
    %c0_4 = arith.constant 0 : index
    %c0_5 = arith.constant 0 : index
    %c0_6 = arith.constant 0 : index
    %2 = vector.load %arg3[%c0_3, %c0_4, %c0_5, %c0_6] : memref<1x3x2x128xf32, #tpu.memory_space<vmem>>, vector<1x1x2x128xf32>
    %3 = vector.shape_cast %2 : vector<1x1x2x128xf32> to vector<2x128xf32>
    %4 = arith.subf %1, %3 : vector<2x128xf32>
    %cst = arith.constant 2.990000e-01 : f32
    %5 = vector.broadcast %cst : f32 to vector<2x128xf32>
    %6 = arith.mulf %4, %5 : vector<2x128xf32>
    %c0_7 = arith.constant 0 : index
    %c1 = arith.constant 1 : index
    %c0_8 = arith.constant 0 : index
    %c0_9 = arith.constant 0 : index
    %7 = vector.load %arg2[%c0_7, %c1, %c0_8, %c0_9] : memref<1x3x2x128xf32, #tpu.memory_space<vmem>>, vector<1x1x2x128xf32>
    %8 = vector.shape_cast %7 : vector<1x1x2x128xf32> to vector<2x128xf32>
    %c0_10 = arith.constant 0 : index
    %c1_11 = arith.constant 1 : index
    %c0_12 = arith.constant 0 : index
    %c0_13 = arith.constant 0 : index
    %9 = vector.load %arg3[%c0_10, %c1_11, %c0_12, %c0_13] : memref<1x3x2x128xf32, #tpu.memory_space<vmem>>, vector<1x1x2x128xf32>
    %10 = vector.shape_cast %9 : vector<1x1x2x128xf32> to vector<2x128xf32>
    %11 = arith.subf %8, %10 : vector<2x128xf32>
    %cst_14 = arith.constant 5.870000e-01 : f32
    %12 = vector.broadcast %cst_14 : f32 to vector<2x128xf32>
    %13 = arith.mulf %11, %12 : vector<2x128xf32>
    %14 = arith.addf %6, %13 : vector<2x128xf32>
    %c0_15 = arith.constant 0 : index
    %c2 = arith.constant 2 : index
    %c0_16 = arith.constant 0 : index
    %c0_17 = arith.constant 0 : index
    %15 = vector.load %arg2[%c0_15, %c2, %c0_16, %c0_17] : memref<1x3x2x128xf32, #tpu.memory_space<vmem>>, vector<1x1x2x128xf32>
    %16 = vector.shape_cast %15 : vector<1x1x2x128xf32> to vector<2x128xf32>
    %c0_18 = arith.constant 0 : index
    %c2_19 = arith.constant 2 : index
    %c0_20 = arith.constant 0 : index
    %c0_21 = arith.constant 0 : index
    %17 = vector.load %arg3[%c0_18, %c2_19, %c0_20, %c0_21] : memref<1x3x2x128xf32, #tpu.memory_space<vmem>>, vector<1x1x2x128xf32>
    %18 = vector.shape_cast %17 : vector<1x1x2x128xf32> to vector<2x128xf32>
    %19 = arith.subf %16, %18 : vector<2x128xf32>
    %cst_22 = arith.constant 1.140000e-01 : f32
    %20 = vector.broadcast %cst_22 : f32 to vector<2x128xf32>
    %21 = arith.mulf %19, %20 : vector<2x128xf32>
    %22 = arith.addf %14, %21 : vector<2x128xf32>
    %23 = math.absf %22 : vector<2x128xf32>
    %cst_23 = arith.constant dense<0.000000e+00> : vector<128xf32>
    %24 = vector.multi_reduction <add>, %23, %cst_23 [0] : vector<2x128xf32> to vector<128xf32>
    %25 = vector.shape_cast %24 : vector<128xf32> to vector<1x128xf32>
    %c0_24 = arith.constant 0 : index
    %c0_25 = arith.constant 0 : index
    %c0_26 = arith.constant 0 : index
    %c0_27 = arith.constant 0 : index
    %26 = vector.load %arg4[%c0_24, %c0_25, %c0_26, %c0_27] : memref<1x1x1x128xf32, #tpu.memory_space<vmem>>, vector<1x1x1x128xf32>
    %27 = vector.shape_cast %26 : vector<1x1x1x128xf32> to vector<1x128xf32>
    %28 = vector.shape_cast %25 : vector<1x128xf32> to vector<1x1x1x128xf32>
    tpu.vector_store %arg4[%c0_24, %c0_25, %c0_26, %c0_27], %28 {strides = array<i32>} : memref<1x1x1x128xf32, #tpu.memory_space<vmem>>, vector<1x1x1x128xf32>,
    return
  }
  func.func @transform_0(%arg0: i32, %arg1: i32) -> (i32, i32, i32, i32) {
    %c0_i32 = arith.constant 0 : i32
    %c0_i32_0 = arith.constant 0 : i32
    %c0_i32_1 = arith.constant 0 : i32
    return %arg0, %c0_i32, %arg1, %c0_i32_0 : i32, i32, i32, i32
  }
  func.func @transform_1(%arg0: i32, %arg1: i32) -> (i32, i32, i32, i32) {
    %c0_i32 = arith.constant 0 : i32
    %c0_i32_0 = arith.constant 0 : i32
    %c0_i32_1 = arith.constant 0 : i32
    return %arg0, %c0_i32, %arg1, %c0_i32_0 : i32, i32, i32, i32
  }
  func.func @transform_2(%arg0: i32, %arg1: i32) -> (i32, i32, i32, i32) {
    %c0_i32 = arith.constant 0 : i32
    %c0_i32_0 = arith.constant 0 : i32
    %c0_i32_1 = arith.constant 0 : i32
    return %arg0, %arg1, %c0_i32, %c0_i32_0 : i32, i32, i32, i32
  }
}

</mosaic_0001>

<llo_original>
// kernel: tpu_custom_call.1
$region0: #{tpu_custom_call.1}
  #allocation0 [shape = 'u32[]', space=smem, size = 0x4, offset = 0x4, fixed_abs, tag = 'smem constant byte address 0x4 - core index']
  #allocation1 [shape = 'u32[72,128]{1,0:T(1,128)}', space=vmem, size = 0x9000, scoped, tag = 'internal scratch']
  %s0 = inlined_call_operand.hbm [shape: f32[2,3,2,128], index: 0, kind: input, shape index: {}]
  %s1 = inlined_call_operand.hbm [shape: f32[2,3,2,128], index: 1, kind: input, shape index: {}]
  %s2 = inlined_call_operand.hbm [shape: f32[2,1,1,128], index: 2, kind: output, shape index: {}]
  %s3 = sld [smem:[#allocation0]]
  $region49: #{tpu_custom_call.1} parent=0
    _
  %s5 = ssub.s32 1, %s3
  %s6 = scalar_select 0, %s5, %s3
  $region1: #{tpu_custom_call.1} parent=0
    #allocation2 [shape = 'u8[6144]{0}', space=vmem, size = 0x1800, scoped, tag = 'input window, operand 0']
    #allocation3 [shape = 's32[2]{0}', space=sflag, size = 0x8, scoped, tag = 'scoped memory for tpu_custom_call.1']
    #allocation4 [shape = 's32[2]{0}', space=sflag, size = 0x8, scoped, tag = 'scoped memory for tpu_custom_call.1']
    #allocation5 [shape = 'u8[6144]{0}', space=vmem, size = 0x1800, scoped, tag = 'input window, operand 1']
    #allocation6 [shape = 's32[2]{0}', space=sflag, size = 0x8, scoped, tag = 'scoped memory for tpu_custom_call.1']
    #allocation7 [shape = 'u8[1024]{0}', space=vmem, size = 0x400, scoped, tag = 'output window, operand 0']
    %7 = vsyncpa [#allocation3], 0
    %s8 = scalar_lea.sflag [#allocation3], 1
    %9 = vsyncpa %s8, 0
    %10 = vsyncpa [#allocation6], 0
    %s11 = scalar_lea.sflag [#allocation6], 1
    %12 = vsyncpa %s11, 0
    %13 = vsyncpa [#allocation4], 0
    %s14 = scalar_lea.sflag [#allocation4], 1
    %15 = vsyncpa %s14, 0
    loop: start=0, step=1, limit=4
    $region2: #{tpu_custom_call.1} parent=1 // loop_pre_header
      _
    $region3: #{tpu_custom_call.1} parent=1 // loop_header
      %s17 = sphi 0, %s21
      %p18 = scmp.ge.s32.totalorder %s17, 4
      %s24 = sphi 0, %s36
      %s25 = sphi 0, %s32
      %s26 = sphi 0, %s24
      %s27 = sphi 0, %s25
      %s28 = sphi 0, %s26
      %s29 = sphi 0, %s27
      %s41 = sphi 0, %s43
      %s44 = sphi 0, %s41
      %s45 = sphi 0, %s44
      %s61 = sphi 0, %s45
      %s69 = sphi 0, %s71
      %s72 = sphi 0, %s69
      %s73 = sphi 0, %s72
      %s89 = sphi 0, %s73
      %s97 = sphi 0, %s99
      %s100 = sphi 0, %s97
      %s101 = sphi 0, %s100
      %s117 = sphi 0, %s101
    $region4: #{tpu_custom_call.1} parent=1 // loop_header_branch
      %20 = sbr.rel (%p18) target = $region8
    $region5: #{tpu_custom_call.1} parent=1 // loop_body
      %s22 = ssub.s32 %s17, 1
      %s23 = ssub.s32 %s17, 2
      %s30 = sadd.s32 1, %s25
      %p31 = scmp.ge.s32.totalorder %s30, 1
      %s32 = scalar_select %p31, 0, %s30
      %s33 = sadd.s32 1, %s24
      %s34 = scalar_select %p31, %s33, %s24
      %p35 = scmp.ge.s32.totalorder %s34, 2
      %s36 = scalar_select %p35, 0, %s34
      %s37 = ssub.s32 %s24, %s36
      %s38 = ssub.s32 %s25, %s32
      %s39 = sor.u32 %s37, %s38
      %p40 = scmp.eq.s32.totalorder %s39, 0
      %s42 = sadd.s32 %s41, 1
      %s43 = scalar_select %p40, %s41, %s42
      %p46 = pneg %p40
      %p47 = scmp.eq.s32.totalorder %s17, 1
      %p48 = por %p46, %p47
      %p49 = scmp.ne.s32.totalorder %s41, %s44
      %p50 = scmp.eq.s32.totalorder %s17, 0
      %p51 = por %p49, %p50
      %p52 = scmp.ne.s32.totalorder %s41, %s44
      %p53 = scmp.eq.s32.totalorder %s22, 1
      %p54 = por %p52, %p53
      %p55 = scmp.ne.s32.totalorder %s44, %s45
      %p56 = scmp.eq.s32.totalorder %s22, 0
      %p57 = por %p55, %p56
      %p58 = scmp.ne.s32.totalorder %s44, %s45
      %p59 = scmp.eq.s32.totalorder %s23, 1
      %p60 = por %p58, %p59
      %p62 = scmp.ne.s32.totalorder %s45, %s61
      %p63 = scmp.eq.s32.totalorder %s23, 0
      %p64 = por %p62, %p63
      %s65 = ssub.s32 %s24, %s36
      %s66 = ssub.s32 %s25, %s32
      %s67 = sor.u32 %s65, %s66
      %p68 = scmp.eq.s32.totalorder %s67, 0
      %s70 = sadd.s32 %s69, 1
      %s71 = scalar_select %p68, %s69, %s70
      %p74 = pneg %p68
      %p75 = scmp.eq.s32.totalorder %s17, 1
      %p76 = por %p74, %p75
      %p77 = scmp.ne.s32.totalorder %s69, %s72
      %p78 = scmp.eq.s32.totalorder %s17, 0
      %p79 = por %p77, %p78
      %p80 = scmp.ne.s32.totalorder %s69, %s72
      %p81 = scmp.eq.s32.totalorder %s22, 1
      %p82 = por %p80, %p81
      %p83 = scmp.ne.s32.totalorder %s72, %s73
      %p84 = scmp.eq.s32.totalorder %s22, 0
      %p85 = por %p83, %p84
      %p86 = scmp.ne.s32.totalorder %s72, %s73
      %p87 = scmp.eq.s32.totalorder %s23, 1
      %p88 = por %p86, %p87
      %p90 = scmp.ne.s32.totalorder %s73, %s89
      %p91 = scmp.eq.s32.totalorder %s23, 0
      %p92 = por %p90, %p91
      %s93 = ssub.s32 %s24, %s36
      %s94 = ssub.s32 %s25, %s32
      %s95 = sor.u32 %s93, %s94
      %p96 = scmp.eq.s32.totalorder %s95, 0
      %s98 = sadd.s32 %s97, 1
      %s99 = scalar_select %p96, %s97, %s98
      %p102 = pneg %p96
      %p103 = scmp.eq.s32.totalorder %s17, 1
      %p104 = por %p102, %p103
      %p105 = scmp.ne.s32.totalorder %s97, %s100
      %p106 = scmp.eq.s32.totalorder %s17, 0
      %p107 = por %p105, %p106
      %p108 = scmp.ne.s32.totalorder %s97, %s100
      %p109 = scmp.eq.s32.totalorder %s22, 1
      %p110 = por %p108, %p109
      %p111 = scmp.ne.s32.totalorder %s100, %s101
      %p112 = scmp.eq.s32.totalorder %s22, 0
      %p113 = por %p111, %p112
      %p114 = scmp.ne.s32.totalorder %s100, %s101
      %p115 = scmp.eq.s32.totalorder %s23, 1
      %p116 = por %p114, %p115
      %p118 = scmp.ne.s32.totalorder %s101, %s117
      %p119 = scmp.eq.s32.totalorder %s23, 0
      %p120 = por %p118, %p119
      %p121 = scmp.le.s32.totalorder 1, %s17
      %p122 = scmp.lt.s32.totalorder %s17, 3
      %p123 = pnand %p121, %p122
      %p124 = pneg %p123
      // Predicated region
      $region9: #{tpu_custom_call.1} parent=5 // pred_check
        _
      $region10: #{tpu_custom_call.1} parent=5 // pred_check_branch
        %126 = sbr.rel (%p123) target = $region12
      $region11: #{tpu_custom_call.1} parent=5 // pred_region
        %s127 = ssub.s32 %s17, 1
      $region12: #{tpu_custom_call.1} parent=5 // pred_fallthru
        _
      %p128 = scmp.lt.s32.totalorder %s17, 2
      // Predicated region
      $region13: #{tpu_custom_call.1} parent=5 // pred_check
        %p129 = pneg %p128
      $region14: #{tpu_custom_call.1} parent=5 // pred_check_branch
        %131 = sbr.rel (%p129) target = $region16
      $region15: #{tpu_custom_call.1} parent=5 // pred_region
        // Predicated region
        $region17: #{tpu_custom_call.1} parent=15 // pred_check
          %p132 = pneg %p51
        $region18: #{tpu_custom_call.1} parent=15 // pred_check_branch
          %134 = sbr.rel (%p132) target = $region20
        $region19: #{tpu_custom_call.1} parent=15 // pred_region
          %s135 = sand.u32 %s41, 1
          %s136 = scalar_lea.sflag [#allocation3], %s135
          %s137 = sand.u32 %s41, 1
          %s138 = smul.addr %s137, 6
          %s139 = scalar_lea.vmem [#allocation2], %s138
          %141 = vsyncadd %s136, 0
          %s142 = smul.addr %s24, 3
          %s143 = sadd.s32 %s25, %s142
          %s144 = smul.addr %s143, 2
          %s145 = scalar_lea.hbm %s0, %s144
          %s146 = sshll.u32 %s145, 4
          %s147 = int_to_ptr.hbm [resolvable:$true] %s146
          %s148 = sshll.u32 %s139, 4
          %s149 = int_to_ptr.vmem [resolvable:$true] %s148
          %154 = dma.hbm_to_vmem [thread:$0]  %s147, 96, %s149, %s136, 32, 32, 2
        $region20: #{tpu_custom_call.1} parent=15 // pred_fallthru
          _
        // Predicated region
        $region21: #{tpu_custom_call.1} parent=15 // pred_check
          %p155 = pneg %p79
        $region22: #{tpu_custom_call.1} parent=15 // pred_check_branch
          %157 = sbr.rel (%p155) target = $region24
        $region23: #{tpu_custom_call.1} parent=15 // pred_region
          %s158 = sand.u32 %s69, 1
          %s159 = scalar_lea.sflag [#allocation6], %s158
          %s160 = sand.u32 %s69, 1
          %s161 = smul.addr %s160, 6
          %s162 = scalar_lea.vmem [#allocation5], %s161
          %164 = vsyncadd %s159, 0
          %s165 = smul.addr %s24, 3
          %s166 = sadd.s32 %s25, %s165
          %s167 = smul.addr %s166, 2
          %s168 = scalar_lea.hbm %s1, %s167
          %s169 = sshll.u32 %s168, 4
          %s170 = int_to_ptr.hbm [resolvable:$true] %s169
          %s171 = sshll.u32 %s162, 4
          %s172 = int_to_ptr.vmem [resolvable:$true] %s171
          %177 = dma.hbm_to_vmem [thread:$0]  %s170, 96, %s172, %s159, 32, 32, 2
        $region24: #{tpu_custom_call.1} parent=15 // pred_fallthru
          _
      $region16: #{tpu_custom_call.1} parent=5 // pred_fallthru
        _
      %p178 = scmp.le.s32.totalorder 1, %s17
      %p179 = scmp.lt.s32.totalorder %s17, 3
      %p180 = pnand %p178, %p179
      %p181 = pneg %p180
      // Predicated region
      $region25: #{tpu_custom_call.1} parent=5 // pred_check
        _
      $region26: #{tpu_custom_call.1} parent=5 // pred_check_branch
        %183 = sbr.rel (%p180) target = $region28
      $region27: #{tpu_custom_call.1} parent=5 // pred_region
        %s184 = ssub.s32 %s17, 1
        %s185 = sand.u32 %s44, 1
        %s186 = scalar_lea.sflag [#allocation3], %s185
        %s187 = sand.u32 %s44, 1
        %s188 = smul.addr %s187, 6
        %s189 = scalar_lea.vmem [#allocation2], %s188
        // Predicated region
        $region29: #{tpu_custom_call.1} parent=27 // pred_check
          %p190 = pneg %p57
        $region30: #{tpu_custom_call.1} parent=27 // pred_check_branch
          %192 = sbr.rel (%p190) target = $region32
        $region31: #{tpu_custom_call.1} parent=27 // pred_region
          %194 = dma.done %s186, 96
        $region32: #{tpu_custom_call.1} parent=27 // pred_fallthru
          _
        %s195 = sand.u32 %s72, 1
        %s196 = scalar_lea.sflag [#allocation6], %s195
        %s197 = sand.u32 %s72, 1
        %s198 = smul.addr %s197, 6
        %s199 = scalar_lea.vmem [#allocation5], %s198
        // Predicated region
        $region33: #{tpu_custom_call.1} parent=27 // pred_check
          %p200 = pneg %p85
        $region34: #{tpu_custom_call.1} parent=27 // pred_check_branch
          %202 = sbr.rel (%p200) target = $region36
        $region35: #{tpu_custom_call.1} parent=27 // pred_region
          %204 = dma.done %s196, 96
        $region36: #{tpu_custom_call.1} parent=27 // pred_fallthru
          _
        %s205 = sand.u32 %s44, 1
        %s206 = scalar_lea.sflag [#allocation3], %s205
        %s207 = sand.u32 %s44, 1
        %s208 = smul.addr %s207, 6
        %s209 = scalar_lea.vmem [#allocation2], %s208
        %p210 = pneg %p57
        %p211 = pneg %p54
        %s212 = sand.u32 %s72, 1
        %s213 = scalar_lea.sflag [#allocation6], %s212
        %s214 = sand.u32 %s72, 1
        %s215 = smul.addr %s214, 6
        %s216 = scalar_lea.vmem [#allocation5], %s215
        %p217 = pneg %p85
        %p218 = pneg %p82
        %p219 = pneg %p113
        %p220 = pneg %p110
        %s221 = sand.u32 %s100, 1
        %s222 = scalar_lea.sflag [#allocation4], %s221
        %s223 = sand.u32 %s100, 1
        %s224 = scalar_lea.vmem [#allocation7], %s223
        %v225 = vld [vmem:[%s189] sm:$0x3]
        %v226 = vld [vmem:[%s199] sm:$0x3]
        %v227 = vsub.f32 %v225, %v226
        %v228 = vmul.f32 %v227, 0.299
        %s229 = scalar_lea.vmem %s189, 2 [#allocation2]
        %v230 = vld [vmem:[%s229] sm:$0x3]
        %s231 = scalar_lea.vmem %s199, 2 [#allocation5]
        %v232 = vld [vmem:[%s231] sm:$0x3]
        %v233 = vsub.f32 %v230, %v232
        %v234 = vmul.f32 %v233, 0.587
        %v235 = vadd.f32 %v228, %v234
        %s236 = scalar_lea.vmem %s189, 4 [#allocation2]
        %v237 = vld [vmem:[%s236] sm:$0x3]
        %s238 = scalar_lea.vmem %s199, 4 [#allocation5]
        %v239 = vld [vmem:[%s238] sm:$0x3]
        %v240 = vsub.f32 %v237, %v239
        %v241 = vmul.f32 %v240, 0.114
        %v242 = vadd.f32 %v235, %v241
        %v243 = vand.u32 2147483647, %v242
        %vm244 = vcmask 1041408
        %v245 = vsel %vm244, %v243, 0.0
        %v246 = vrot.slane %v245, 4
        %v247 = vadd.f32 %v245, %v246
        %v248 = vrot.slane %v247, 2
        %v249 = vadd.f32 %v247, %v248
        %v250 = vrot.slane %v249, 1
        %v251 = vadd.f32 %v249, %v250
        %252 = vst [vmem:[%s224] sm:$0x1] %v251
        %s253 = sand.u32 %s100, 1
        %s254 = scalar_lea.sflag [#allocation4], %s253
        %s255 = sand.u32 %s100, 1
        %s256 = scalar_lea.vmem [#allocation7], %s255
        // Predicated region
        $region37: #{tpu_custom_call.1} parent=27 // pred_check
          %p257 = pneg %p110
        $region38: #{tpu_custom_call.1} parent=27 // pred_check_branch
          %259 = sbr.rel (%p257) target = $region40
        $region39: #{tpu_custom_call.1} parent=27 // pred_region
          %261 = vsyncadd %s254, 0
          %s262 = sadd.s32 %s27, %s26
          %s263 = scalar_lea.hbm %s2, %s262
          %s265 = sshll.u32 %s256, 4
          %s266 = int_to_ptr.vmem [resolvable:$true] %s265
          %s267 = sshll.u32 %s263, 4
          %s268 = int_to_ptr.hbm [resolvable:$true] %s267
          %270 = dma.vmem_to_hbm [thread:$0]  %s266, 16, %s268, %s254
        $region40: #{tpu_custom_call.1} parent=27 // pred_fallthru
          _
      $region28: #{tpu_custom_call.1} parent=5 // pred_fallthru
        _
      %p271 = scmp.le.s32.totalorder 2, %s17
      // Predicated region
      $region41: #{tpu_custom_call.1} parent=5 // pred_check
        %p272 = pneg %p271
      $region42: #{tpu_custom_call.1} parent=5 // pred_check_branch
        %274 = sbr.rel (%p272) target = $region44
      $region43: #{tpu_custom_call.1} parent=5 // pred_region
        %s275 = ssub.s32 %s17, 2
        // Predicated region
        $region45: #{tpu_custom_call.1} parent=43 // pred_check
          %p276 = pneg %p116
        $region46: #{tpu_custom_call.1} parent=43 // pred_check_branch
          %278 = sbr.rel (%p276) target = $region48
        $region47: #{tpu_custom_call.1} parent=43 // pred_region
          %s279 = sand.u32 %s101, 1
          %s280 = scalar_lea.sflag [#allocation4], %s279
          %s281 = sand.u32 %s101, 1
          %s282 = scalar_lea.vmem [#allocation7], %s281
          %284 = dma.done %s280, 16
        $region48: #{tpu_custom_call.1} parent=43 // pred_fallthru
          _
      $region44: #{tpu_custom_call.1} parent=5 // pred_fallthru
        _
    $region6: #{tpu_custom_call.1} parent=1 // loop_footer
      %s21 = sadd.s32 1, %s17
    $region7: #{tpu_custom_call.1} parent=1 // loop_footer_branch
      %16 = sbr.rel target = $region3
    $region8: #{tpu_custom_call.1} parent=1 // loop_exit
      _
    %285 = vsyncpa [#allocation3], 1
    %s286 = scalar_lea.sflag [#allocation3], 1
    %287 = vsyncpa %s286, 1
    %288 = vsyncpa [#allocation6], 1
    %s289 = scalar_lea.sflag [#allocation6], 1
    %290 = vsyncpa %s289, 1
    %291 = vsyncpa [#allocation4], 1
    %s292 = scalar_lea.sflag [#allocation4], 1
    %293 = vsyncpa %s292, 1

</llo_original>
